<compile_context>
chip_gen: v7x
topology: tpu7x:2x2x1
jax: 0.10.0
libtpu: 0.0.40
codegen_flags: <defaults>
</compile_context>

<pallas_src>
import functools

import jax
import jax.numpy as jnp
from jax.experimental import pallas as pl
from jax.experimental.pallas import tpu as pltpu

EPS = 1e-5
VMEM_LIMIT_BYTES = 32 * 1024 * 1024
MAX_TILE_LANES = 32768            # production sweep: up to ~128K on v5e/v6e, cap lower on v7x


# --------------------------------------------------------------------------- #
# Small channel-mixing matmul on the VPU (unrolled broadcast-FMA over channels).
# w: (c_out, c_in) f32, h: (c_in, TP) f32  ->  (c_out, TP) f32
# --------------------------------------------------------------------------- #
def _small_matmul(w, h):
    c_in = w.shape[1]
    acc = w[:, 0:1] * h[0:1, :]
    for c in range(1, c_in):
        acc = acc + w[:, c:c + 1] * h[c:c + 1, :]
    return acc


# --------------------------------------------------------------------------- #
# Pass 1: per-channel moments of x (for BN1 batch statistics), per batch element.
# --------------------------------------------------------------------------- #
def _x_moments_kernel(x_ref, xsum_ref, xsq_ref):
    # x_ref: (C_in, TP) tile; outputs: (C_in, 1) per-batch accumulators over pixel tiles.
    @pl.when(pl.program_id(1) == 0)
    def _():
        xsum_ref[...] = jnp.zeros_like(xsum_ref)
        xsq_ref[...] = jnp.zeros_like(xsq_ref)

    x = x_ref[...]
    xsum_ref[...] += jnp.sum(x, axis=1, keepdims=True)
    xsq_ref[...] += jnp.sum(x * x, axis=1, keepdims=True)


# --------------------------------------------------------------------------- #
# Pass 2: per-channel moments of y = w1 @ relu(BN1(x))  (for BN2 statistics).
# Padded pixel lanes (zero-padded x) would give h = relu(t1) != 0, so they are masked.
# --------------------------------------------------------------------------- #
def _y_moments_kernel(x_ref, s1_ref, t1_ref, w1_ref, ysum_ref, ysq_ref,
                      *, hw, tile_p, padded):
    @pl.when(pl.program_id(1) == 0)
    def _():
        ysum_ref[...] = jnp.zeros_like(ysum_ref)
        ysq_ref[...] = jnp.zeros_like(ysq_ref)

    h = jnp.maximum(x_ref[...] * s1_ref[...] + t1_ref[...], 0.0)          # BN1 + ReLU
    if padded:
        lane = jax.lax.broadcasted_iota(jnp.int32, h.shape, 1)
        valid = (pl.program_id(1) * tile_p + lane) < hw
        h = jnp.where(valid, h, 0.0)
    y = _small_matmul(w1_ref[...], h)                                     # 1x1 conv #1
    ysum_ref[...] += jnp.sum(y, axis=1, keepdims=True)
    ysq_ref[...] += jnp.sum(y * y, axis=1, keepdims=True)


# --------------------------------------------------------------------------- #
# Pass 3: fused BN1 -> ReLU -> conv1 -> BN2 -> ReLU -> conv2 per pixel tile.
# Padded lanes produce garbage that is sliced off in the wrapper (per-pixel op).
# --------------------------------------------------------------------------- #
def _output_kernel(x_ref, s1_ref, t1_ref, w1_ref, s2_ref, t2_ref, w2_ref, o_ref):
    h = jnp.maximum(x_ref[...] * s1_ref[...] + t1_ref[...], 0.0)
    y = _small_matmul(w1_ref[...], h)
    z = jnp.maximum(y * s2_ref[...] + t2_ref[...], 0.0)                   # BN2 + ReLU
    o_ref[...] = _small_matmul(w2_ref[...], z)


def _round_up(x, m):
    return ((x + m - 1) // m) * m


def _choose_tile(hw, max_tile):
    """Return (TP, HW_pad): HW_pad = hw rounded up to a multiple of 128 (minimal
    padding), TP = largest multiple of 128 dividing HW_pad with TP <= max_tile."""
    hw_pad = _round_up(hw, 128)
    m = hw_pad // 128
    max_f = max(1, min(m, max_tile // 128))
    for f in range(max_f, 0, -1):
        if m % f == 0:
            return 128 * f, hw_pad
    return 128, hw_pad


def up_sampling_sequence(x_nchw, params, *, max_tile=MAX_TILE_LANES):
    """x_nchw: (N, C_in, H, W) float32. Returns (N, C_out, H, W) float32."""
    g1, b1, w1, g2, b2, w2 = (
        params["gamma1"], params["beta1"], params["w1"],
        params["gamma2"], params["beta2"], params["w2"],
    )
    N, C_in, H, W = x_nchw.shape
    C_out = w1.shape[0]
    hw = H * W

    TP, hw_pad = _choose_tile(hw, max_tile)
    n_tiles = hw_pad // TP
    padded = hw_pad != hw

    # Free contiguous view (no transpose): NCHW -> (N, C_in, H*W).
    x3 = x_nchw.reshape(N, C_in, hw)
    if padded:
        # Zero pad the pixel axis up to a multiple of 128 (only when H*W isn't already).
        x3 = jnp.pad(x3, ((0, 0), (0, 0), (0, hw_pad - hw)))

    p_total = N * hw                       # true pixel count for the batch statistics
    inv_p = jnp.float32(1.0 / p_total)

    x_spec = pl.BlockSpec((pl.Squeezed(), C_in, TP), lambda n, p: (n, 0, p))

    def const_spec(shape):
        return pl.BlockSpec(shape, lambda n, p: (0,) * len(shape))

    def moment_out_spec(c):
        return pl.BlockSpec((pl.Squeezed(), c, 1), lambda n, p: (n, 0, 0))

    # ---------------- pass 1: BN1 batch statistics (per-batch partials) ---------------- #
    xsum_nb, xsq_nb = pl.pallas_call(
        _x_moments_kernel,
        out_shape=(jax.ShapeDtypeStruct((N, C_in, 1), jnp.float32),
                   jax.ShapeDtypeStruct((N, C_in, 1), jnp.float32)),
        grid_spec=pltpu.PrefetchScalarGridSpec(
            num_scalar_prefetch=0,
            grid=(N, n_tiles),
            in_specs=[x_spec],
            out_specs=[moment_out_spec(C_in), moment_out_spec(C_in)]),
        compiler_params=pltpu.CompilerParams(
            dimension_semantics=("parallel", "arbitrary"),   # N shards across v7x TCs
            vmem_limit_bytes=VMEM_LIMIT_BYTES),
    )(x3)

    xsum = jnp.sum(xsum_nb, axis=0)                  # (C_in, 1)
    xsq = jnp.sum(xsq_nb, axis=0)
    mean1 = xsum * inv_p
    var1 = jnp.maximum(xsq * inv_p - mean1 * mean1, 0.0)   # biased var, cancellation-clamped
    s1 = g1.reshape(C_in, 1) * jax.lax.rsqrt(var1 + EPS)
    t1 = b1.reshape(C_in, 1) - mean1 * s1

    # ---------------- pass 2: BN2 batch statistics (per-batch partials) ---------------- #
    y_moments = functools.partial(_y_moments_kernel, hw=hw, tile_p=TP, padded=padded)
    ysum_nb, ysq_nb = pl.pallas_call(
        y_moments,
        out_shape=(jax.ShapeDtypeStruct((N, C_out, 1), jnp.float32),
                   jax.ShapeDtypeStruct((N, C_out, 1), jnp.float32)),
        grid_spec=pltpu.PrefetchScalarGridSpec(
            num_scalar_prefetch=0,
            grid=(N, n_tiles),
            in_specs=[x_spec,
                      const_spec((C_in, 1)),
                      const_spec((C_in, 1)),
                      const_spec((C_out, C_in))],
            out_specs=[moment_out_spec(C_out), moment_out_spec(C_out)]),
        compiler_params=pltpu.CompilerParams(
            dimension_semantics=("parallel", "arbitrary"),
            vmem_limit_bytes=VMEM_LIMIT_BYTES),
    )(x3, s1, t1, w1)

    ysum = jnp.sum(ysum_nb, axis=0)
    ysq = jnp.sum(ysq_nb, axis=0)
    mean2 = ysum * inv_p
    var2 = jnp.maximum(ysq * inv_p - mean2 * mean2, 0.0)
    s2 = g2.reshape(C_out, 1) * jax.lax.rsqrt(var2 + EPS)
    t2 = b2.reshape(C_out, 1) - mean2 * s2

    # ---------------- pass 3: fused output, fully parallel per (batch, tile) ------------ #
    out3 = pl.pallas_call(
        _output_kernel,
        out_shape=jax.ShapeDtypeStruct((N, C_out, hw_pad), jnp.float32),
        grid_spec=pltpu.PrefetchScalarGridSpec(
            num_scalar_prefetch=0,
            grid=(N, n_tiles),
            in_specs=[x_spec,
                      const_spec((C_in, 1)),
                      const_spec((C_in, 1)),
                      const_spec((C_out, C_in)),
                      const_spec((C_out, 1)),
                      const_spec((C_out, 1)),
                      const_spec((C_out, C_out))],
            out_specs=pl.BlockSpec((pl.Squeezed(), C_out, TP), lambda n, p: (n, 0, p))),
        compiler_params=pltpu.CompilerParams(
            dimension_semantics=("parallel", "parallel"),    # megacore-shardable
            vmem_limit_bytes=VMEM_LIMIT_BYTES),
    )(x3, s1, t1, w1, s2, t2, w2)

    if padded:
        out3 = out3[:, :, :hw]
    return out3.reshape(N, C_out, H, W)     # free view back to NCHW (no transpose)


def make_params(key, n_inputs, n_outputs):
    k1, k2, k3, k4, k5, k6 = jax.random.split(key, 6)
    return {
        "gamma1": 1.0 + 0.1 * jax.random.normal(k1, (n_inputs,), jnp.float32),
        "beta1": 0.1 * jax.random.normal(k2, (n_inputs,), jnp.float32),
        "w1": jax.random.normal(k3, (n_outputs, n_inputs), jnp.float32)
              / jnp.sqrt(jnp.float32(n_inputs)),
        "gamma2": 1.0 + 0.1 * jax.random.normal(k4, (n_outputs,), jnp.float32),
        "beta2": 0.1 * jax.random.normal(k5, (n_outputs,), jnp.float32),
        "w2": jax.random.normal(k6, (n_outputs, n_outputs), jnp.float32)
              / jnp.sqrt(jnp.float32(n_outputs)),
    }


def reference(x_nchw, params):
    """Pure-JAX reference matching PyTorch training-mode semantics."""
    g1, b1, w1, g2, b2, w2 = (
        params["gamma1"], params["beta1"], params["w1"],
        params["gamma2"], params["beta2"], params["w2"],
    )

    def bn(x, g, b):
        mean = jnp.mean(x, axis=(0, 2, 3), keepdims=True)
        var = jnp.mean((x - mean) ** 2, axis=(0, 2, 3), keepdims=True)
        xn = (x - mean) / jnp.sqrt(var + EPS)
        return xn * g[None, :, None, None] + b[None, :, None, None]

    h = jnp.maximum(bn(x_nchw, g1, b1), 0.0)
    y = jnp.einsum("oc,nchw->nohw", w1, h)
    h2 = jnp.maximum(bn(y, g2, b2), 0.0)
    return jnp.einsum("oc,nchw->nohw", w2, h2)


if __name__ == "__main__":
    n_inputs, n_outputs = 4, 8
    key = jax.random.PRNGKey(0)
    kx1, kx2, kp = jax.random.split(key, 3)
    params = make_params(kp, n_inputs, n_outputs)

    # Case 1: N=2, H=W=16 (HW=256 pixels). max_tile=128 forces a 2-tile pixel grid so the
    # cross-tile moment accumulation and per-batch partial reduction paths are exercised.
    # Production sizes should use the default max_tile (large lane-dense tiles).
    x1 = jax.random.normal(kx1, (2, n_inputs, 16, 16), jnp.float32)
    out1 = jax.block_until_ready(up_sampling_sequence(x1, params, max_tile=128))
    ref1 = reference(x1, params)
    assert out1.shape == ref1.shape, (out1.shape, ref1.shape)
    assert jnp.allclose(out1, ref1, atol=2e-4, rtol=2e-4), (
        float(jnp.max(jnp.abs(out1 - ref1))))

    # Case 2: H=W=15 (HW=225, not a multiple of 128) exercises the zero-pad + lane-mask
    # path for the BN2 statistics and the padded-output slice.
    x2 = jax.random.normal(kx2, (2, n_inputs, 15, 15), jnp.float32)
    out2 = jax.block_until_ready(up_sampling_sequence(x2, params, max_tile=128))
    ref2 = reference(x2, params)
    assert out2.shape == ref2.shape, (out2.shape, ref2.shape)
    assert jnp.allclose(out2, ref2, atol=2e-4, rtol=2e-4), (
        float(jnp.max(jnp.abs(out2 - ref2))))

    print("KERNEL_OK")
</pallas_src>

<mosaic_0001>
module attributes {stable_mosaic.version = 11 : i64} {
  func.func @_x_moments_kernel(%arg0: i32, %arg1: i32, %arg2: memref<1x4x128xf32, #tpu.memory_space<vmem>>, %arg3: memref<1x4x1xf32, #tpu.memory_space<vmem>>, %arg4: memref<1x4x1xf32, #tpu.memory_space<vmem>>) attributes {dimension_semantics = [#tpu.dimension_semantics<parallel>, #tpu.dimension_semantics<arbitrary>], iteration_bounds = array<i64: 2, 2>, scalar_prefetch = 0 : i64, scratch_operands = 0 : i64, tpu.core_type = #tpu.core_type<tc>, window_params = [{transform_indices = @transform_0, window_bounds = array<i64: 1, 4, 128>}, {transform_indices = @transform_1, window_bounds = array<i64: 1, 4, 1>}, {transform_indices = @transform_2, window_bounds = array<i64: 1, 4, 1>}]} {
    %c0_i32 = arith.constant 0 : i32
    %0 = arith.cmpi eq, %arg1, %c0_i32 : i32
    %1 = arith.extui %0 : i1 to i32
    %c0_i32_0 = arith.constant 0 : i32
    %2 = arith.cmpi ne, %1, %c0_i32_0 : i32
    scf.if %2 {
      %cst_16 = arith.constant 0.000000e+00 : f32
      %22 = vector.broadcast %cst_16 : f32 to vector<4x1xf32>
      %c0_17 = arith.constant 0 : index
      %c0_18 = arith.constant 0 : index
      %c0_19 = arith.constant 0 : index
      %23 = vector.load %arg3[%c0_17, %c0_18, %c0_19] : memref<1x4x1xf32, #tpu.memory_space<vmem>>, vector<1x4x1xf32>
      %24 = vector.shape_cast %23 : vector<1x4x1xf32> to vector<4x1xf32>
      %25 = vector.shape_cast %22 : vector<4x1xf32> to vector<1x4x1xf32>
      tpu.vector_store %arg3[%c0_17, %c0_18, %c0_19], %25 {strides = array<i32>} : memref<1x4x1xf32, #tpu.memory_space<vmem>>, vector<1x4x1xf32>,
      %cst_20 = arith.constant 0.000000e+00 : f32
      %26 = vector.broadcast %cst_20 : f32 to vector<4x1xf32>
      %c0_21 = arith.constant 0 : index
      %c0_22 = arith.constant 0 : index
      %c0_23 = arith.constant 0 : index
      %27 = vector.load %arg4[%c0_21, %c0_22, %c0_23] : memref<1x4x1xf32, #tpu.memory_space<vmem>>, vector<1x4x1xf32>
      %28 = vector.shape_cast %27 : vector<1x4x1xf32> to vector<4x1xf32>
      %29 = vector.shape_cast %26 : vector<4x1xf32> to vector<1x4x1xf32>
      tpu.vector_store %arg4[%c0_21, %c0_22, %c0_23], %29 {strides = array<i32>} : memref<1x4x1xf32, #tpu.memory_space<vmem>>, vector<1x4x1xf32>,
    } else {
    }
    %c0 = arith.constant 0 : index
    %c0_1 = arith.constant 0 : index
    %c0_2 = arith.constant 0 : index
    %3 = vector.load %arg2[%c0, %c0_1, %c0_2] : memref<1x4x128xf32, #tpu.memory_space<vmem>>, vector<1x4x128xf32>
    %4 = vector.shape_cast %3 : vector<1x4x128xf32> to vector<4x128xf32>
    %c0_3 = arith.constant 0 : index
    %c0_4 = arith.constant 0 : index
    %c0_5 = arith.constant 0 : index
    %5 = vector.load %arg3[%c0_3, %c0_4, %c0_5] : memref<1x4x1xf32, #tpu.memory_space<vmem>>, vector<1x4x1xf32>
    %6 = vector.shape_cast %5 : vector<1x4x1xf32> to vector<4x1xf32>
    %cst = arith.constant dense<0.000000e+00> : vector<4xf32>
    %7 = vector.multi_reduction <add>, %4, %cst [1] : vector<4x128xf32> to vector<4xf32>
    %8 = vector.shape_cast %7 : vector<4xf32> to vector<4x1xf32>
    %9 = arith.addf %6, %8 : vector<4x1xf32>
    %c0_6 = arith.constant 0 : index
    %c0_7 = arith.constant 0 : index
    %c0_8 = arith.constant 0 : index
    %10 = vector.load %arg3[%c0_6, %c0_7, %c0_8] : memref<1x4x1xf32, #tpu.memory_space<vmem>>, vector<1x4x1xf32>
    %11 = vector.shape_cast %10 : vector<1x4x1xf32> to vector<4x1xf32>
    %12 = vector.shape_cast %9 : vector<4x1xf32> to vector<1x4x1xf32>
    tpu.vector_store %arg3[%c0_6, %c0_7, %c0_8], %12 {strides = array<i32>} : memref<1x4x1xf32, #tpu.memory_space<vmem>>, vector<1x4x1xf32>,
    %c0_9 = arith.constant 0 : index
    %c0_10 = arith.constant 0 : index
    %c0_11 = arith.constant 0 : index
    %13 = vector.load %arg4[%c0_9, %c0_10, %c0_11] : memref<1x4x1xf32, #tpu.memory_space<vmem>>, vector<1x4x1xf32>
    %14 = vector.shape_cast %13 : vector<1x4x1xf32> to vector<4x1xf32>
    %15 = arith.mulf %4, %4 : vector<4x128xf32>
    %cst_12 = arith.constant dense<0.000000e+00> : vector<4xf32>
    %16 = vector.multi_reduction <add>, %15, %cst_12 [1] : vector<4x128xf32> to vector<4xf32>
    %17 = vector.shape_cast %16 : vector<4xf32> to vector<4x1xf32>
    %18 = arith.addf %14, %17 : vector<4x1xf32>
    %c0_13 = arith.constant 0 : index
    %c0_14 = arith.constant 0 : index
    %c0_15 = arith.constant 0 : index
    %19 = vector.load %arg4[%c0_13, %c0_14, %c0_15] : memref<1x4x1xf32, #tpu.memory_space<vmem>>, vector<1x4x1xf32>
    %20 = vector.shape_cast %19 : vector<1x4x1xf32> to vector<4x1xf32>
    %21 = vector.shape_cast %18 : vector<4x1xf32> to vector<1x4x1xf32>
    tpu.vector_store %arg4[%c0_13, %c0_14, %c0_15], %21 {strides = array<i32>} : memref<1x4x1xf32, #tpu.memory_space<vmem>>, vector<1x4x1xf32>,
    return
  }
  func.func @transform_0(%arg0: i32, %arg1: i32) -> (i32, i32, i32) {
    %c0_i32 = arith.constant 0 : i32
    %c0_i32_0 = arith.constant 0 : i32
    return %arg0, %c0_i32, %arg1 : i32, i32, i32
  }
  func.func @transform_1(%arg0: i32, %arg1: i32) -> (i32, i32, i32) {
    %c0_i32 = arith.constant 0 : i32
    %c0_i32_0 = arith.constant 0 : i32
    %c0_i32_1 = arith.constant 0 : i32
    return %arg0, %c0_i32, %c0_i32_0 : i32, i32, i32
  }
  func.func @transform_2(%arg0: i32, %arg1: i32) -> (i32, i32, i32) {
    %c0_i32 = arith.constant 0 : i32
    %c0_i32_0 = arith.constant 0 : i32
    %c0_i32_1 = arith.constant 0 : i32
    return %arg0, %c0_i32, %c0_i32_0 : i32, i32, i32
  }
}

</mosaic_0001>

<llo_original>
// kernel: tpu_custom_call.1
$region0: #{tpu_custom_call.1}
  #allocation0 [shape = 'u32[]', space=smem, size = 0x4, offset = 0x4, fixed_abs, tag = 'smem constant byte address 0x4 - core index']
  #allocation1 [shape = 'u32[144,128]{1,0:T(1,128)}', space=vmem, size = 0x12000, scoped, tag = 'internal scratch']
  %s0 = inlined_call_operand.hbm [shape: f32[2,4,256], index: 0, kind: input, shape index: {}]
  %s1 = inlined_call_operand.vmem [shape: f32[2,4,1], index: 1, kind: output, shape index: {0}]
  %s2 = inlined_call_operand.vmem [shape: f32[2,4,1], index: 2, kind: output, shape index: {1}]
  %3 = xla_tuple %s1, %s2
  %s4 = sld [smem:[#allocation0]]
  $region53: #{tpu_custom_call.1} parent=0
    _
  %s6 = ssub.s32 1, %s4
  %s7 = scalar_select 0, %s6, %s4
  $region1: #{tpu_custom_call.1} parent=0
    #allocation2 [shape = 'u8[4096]{0}', space=vmem, size = 0x1000, scoped, tag = 'input window, operand 0']
    #allocation3 [shape = 's32[2]{0}', space=sflag, size = 0x8, scoped, tag = 'scoped memory for tpu_custom_call.1']
    %8 = vsyncpa [#allocation3], 0
    %s9 = scalar_lea.sflag [#allocation3], 1
    %10 = vsyncpa %s9, 0
    loop: start=0, step=1, limit=6
    $region2: #{tpu_custom_call.1} parent=1 // loop_pre_header
      _
    $region3: #{tpu_custom_call.1} parent=1 // loop_header
      %s12 = sphi 0, %s16
      %p13 = scmp.ge.s32.totalorder %s12, 6
      %s19 = sphi 0, %s31
      %s20 = sphi 0, %s27
      %s21 = sphi 0, %s19
      %s22 = sphi 0, %s20
      %s23 = sphi 0, %s21
      %s24 = sphi 0, %s22
      %s36 = sphi 0, %s38
      %s39 = sphi 0, %s36
      %s40 = sphi 0, %s39
      %s56 = sphi 0, %s40
      %s62 = sphi 0, %s64
      %s65 = sphi 0, %s62
      %s66 = sphi 0, %s65
      %s82 = sphi 0, %s66
      %s88 = sphi 0, %s90
      %s91 = sphi 0, %s88
      %s92 = sphi 0, %s91
      %s108 = sphi 0, %s92
    $region4: #{tpu_custom_call.1} parent=1 // loop_header_branch
      %15 = sbr.rel (%p13) target = $region8
    $region5: #{tpu_custom_call.1} parent=1 // loop_body
      %s17 = ssub.s32 %s12, 1
      %s18 = ssub.s32 %s12, 2
      %s25 = sadd.s32 1, %s20
      %p26 = scmp.ge.s32.totalorder %s25, 2
      %s27 = scalar_select %p26, 0, %s25
      %s28 = sadd.s32 1, %s19
      %s29 = scalar_select %p26, %s28, %s19
      %p30 = scmp.ge.s32.totalorder %s29, 2
      %s31 = scalar_select %p30, 0, %s29
      %s32 = ssub.s32 %s19, %s31
      %s33 = ssub.s32 %s20, %s27
      %s34 = sor.u32 %s32, %s33
      %p35 = scmp.eq.s32.totalorder %s34, 0
      %s37 = sadd.s32 %s36, 1
      %s38 = scalar_select %p35, %s36, %s37
      %p41 = pneg %p35
      %p42 = scmp.eq.s32.totalorder %s12, 3
      %p43 = por %p41, %p42
      %p44 = scmp.ne.s32.totalorder %s36, %s39
      %p45 = scmp.eq.s32.totalorder %s12, 0
      %p46 = por %p44, %p45
      %p47 = scmp.ne.s32.totalorder %s36, %s39
      %p48 = scmp.eq.s32.totalorder %s17, 3
      %p49 = por %p47, %p48
      %p50 = scmp.ne.s32.totalorder %s39, %s40
      %p51 = scmp.eq.s32.totalorder %s17, 0
      %p52 = por %p50, %p51
      %p53 = scmp.ne.s32.totalorder %s39, %s40
      %p54 = scmp.eq.s32.totalorder %s18, 3
      %p55 = por %p53, %p54
      %p57 = scmp.ne.s32.totalorder %s40, %s56
      %p58 = scmp.eq.s32.totalorder %s18, 0
      %p59 = por %p57, %p58
      %s60 = ssub.s32 %s19, %s31
      %p61 = scmp.eq.s32.totalorder %s60, 0
      %s63 = sadd.s32 %s62, 1
      %s64 = scalar_select %p61, %s62, %s63
      %p67 = pneg %p61
      %p68 = scmp.eq.s32.totalorder %s12, 3
      %p69 = por %p67, %p68
      %p70 = scmp.ne.s32.totalorder %s62, %s65
      %p71 = scmp.eq.s32.totalorder %s12, 0
      %p72 = por %p70, %p71
      %p73 = scmp.ne.s32.totalorder %s62, %s65
      %p74 = scmp.eq.s32.totalorder %s17, 3
      %p75 = por %p73, %p74
      %p76 = scmp.ne.s32.totalorder %s65, %s66
      %p77 = scmp.eq.s32.totalorder %s17, 0
      %p78 = por %p76, %p77
      %p79 = scmp.ne.s32.totalorder %s65, %s66
      %p80 = scmp.eq.s32.totalorder %s18, 3
      %p81 = por %p79, %p80
      %p83 = scmp.ne.s32.totalorder %s66, %s82
      %p84 = scmp.eq.s32.totalorder %s18, 0
      %p85 = por %p83, %p84
      %s86 = ssub.s32 %s19, %s31
      %p87 = scmp.eq.s32.totalorder %s86, 0
      %s89 = sadd.s32 %s88, 1
      %s90 = scalar_select %p87, %s88, %s89
      %p93 = pneg %p87
      %p94 = scmp.eq.s32.totalorder %s12, 3
      %p95 = por %p93, %p94
      %p96 = scmp.ne.s32.totalorder %s88, %s91
      %p97 = scmp.eq.s32.totalorder %s12, 0
      %p98 = por %p96, %p97
      %p99 = scmp.ne.s32.totalorder %s88, %s91
      %p100 = scmp.eq.s32.totalorder %s17, 3
      %p101 = por %p99, %p100
      %p102 = scmp.ne.s32.totalorder %s91, %s92
      %p103 = scmp.eq.s32.totalorder %s17, 0
      %p104 = por %p102, %p103
      %p105 = scmp.ne.s32.totalorder %s91, %s92
      %p106 = scmp.eq.s32.totalorder %s18, 3
      %p107 = por %p105, %p106
      %p109 = scmp.ne.s32.totalorder %s92, %s108
      %p110 = scmp.eq.s32.totalorder %s18, 0
      %p111 = por %p109, %p110
      %p112 = scmp.le.s32.totalorder 1, %s12
      %p113 = scmp.lt.s32.totalorder %s12, 5
      %p114 = pnand %p112, %p113
      %p115 = pneg %p114
      // Predicated region
      $region9: #{tpu_custom_call.1} parent=5 // pred_check
        _
      $region10: #{tpu_custom_call.1} parent=5 // pred_check_branch
        %117 = sbr.rel (%p114) target = $region12
      $region11: #{tpu_custom_call.1} parent=5 // pred_region
        %s118 = ssub.s32 %s12, 1
      $region12: #{tpu_custom_call.1} parent=5 // pred_fallthru
        _
      %p119 = scmp.lt.s32.totalorder %s12, 4
      // Predicated region
      $region13: #{tpu_custom_call.1} parent=5 // pred_check
        %p120 = pneg %p119
      $region14: #{tpu_custom_call.1} parent=5 // pred_check_branch
        %122 = sbr.rel (%p120) target = $region16
      $region15: #{tpu_custom_call.1} parent=5 // pred_region
        // Predicated region
        $region17: #{tpu_custom_call.1} parent=15 // pred_check
          %p123 = pneg %p46
        $region18: #{tpu_custom_call.1} parent=15 // pred_check_branch
          %125 = sbr.rel (%p123) target = $region20
        $region19: #{tpu_custom_call.1} parent=15 // pred_region
          %s126 = sand.u32 %s36, 1
          %s127 = scalar_lea.sflag [#allocation3], %s126
          %s128 = sand.u32 %s36, 1
          %s129 = smul.addr %s128, 4
          %s130 = scalar_lea.vmem [#allocation2], %s129
          %s132 = ssub.s32 64, 64
          %133 = vsyncadd %s127, %s132
          %s134 = smul.addr %s19, 2
          %s135 = sadd.s32 %s20, %s134
          %s136 = smul.addr %s135, 64
          %s137 = scalar_lea.hbm %s0, %s136
          %s139 = sshll.u32 %s130, 4
          %s140 = int_to_ptr.vmem [resolvable:$true] %s139
          %142 = dma.hbm_to_vmem [thread:$0]  %s137, 64, %s140, %s127
        $region20: #{tpu_custom_call.1} parent=15 // pred_fallthru
          _
      $region16: #{tpu_custom_call.1} parent=5 // pred_fallthru
        _
      %p143 = scmp.le.s32.totalorder 1, %s12
      %p144 = scmp.lt.s32.totalorder %s12, 5
      %p145 = pnand %p143, %p144
      %p146 = pneg %p145
      // Predicated region
      $region21: #{tpu_custom_call.1} parent=5 // pred_check
        _
      $region22: #{tpu_custom_call.1} parent=5 // pred_check_branch
        %148 = sbr.rel (%p145) target = $region24
      $region23: #{tpu_custom_call.1} parent=5 // pred_region
        %s149 = ssub.s32 %s12, 1
        %s150 = sand.u32 %s39, 1
        %s151 = scalar_lea.sflag [#allocation3], %s150
        %s152 = sand.u32 %s39, 1
        %s153 = smul.addr %s152, 4
        %s154 = scalar_lea.vmem [#allocation2], %s153
        // Predicated region
        $region25: #{tpu_custom_call.1} parent=23 // pred_check
          %p155 = pneg %p52
        $region26: #{tpu_custom_call.1} parent=23 // pred_check_branch
          %157 = sbr.rel (%p155) target = $region28
        $region27: #{tpu_custom_call.1} parent=23 // pred_region
          %158 = dma.done %s151, 64
        $region28: #{tpu_custom_call.1} parent=23 // pred_fallthru
          _
        %s159 = sand.u32 %s39, 1
        %s160 = scalar_lea.sflag [#allocation3], %s159
        %s161 = sand.u32 %s39, 1
        %s162 = smul.addr %s161, 4
        %s163 = scalar_lea.vmem [#allocation2], %s162
        %p164 = pneg %p52
        %p165 = pneg %p49
        %p166 = pneg %p78
        %p167 = pneg %p75
        %p168 = scmp.lt.s32.totalorder %s21, 1
        %s169 = scalar_select %p168, %s21, 1
        %s170 = smul.addr %s169, 4
        %s171 = scalar_lea.vmem %s1, %s170
        %p172 = pneg %p104
        %p173 = pneg %p101
        %p174 = scmp.lt.s32.totalorder %s21, 1
        %s175 = scalar_select %p174, %s21, 1
        %s176 = smul.addr %s175, 4
        %s177 = scalar_lea.vmem %s2, %s176
        %p178 = scmp.lt.s32.totalorder %s21, 1
        %s179 = scalar_select %p178, %s21, 1
        %s180 = smul.addr %s179, 4
        %s181 = scalar_lea.vmem %s1, %s180
        %p182 = scmp.lt.s32.totalorder %s21, 1
        %s183 = scalar_select %p182, %s21, 1
        %s184 = smul.addr %s183, 4
        %s185 = scalar_lea.vmem %s2, %s184
        %p186 = scmp.eq.s32.totalorder %s22, 0
        // Predicated region
        $region29: #{tpu_custom_call.1} parent=23 // pred_check
          %p187 = pneg %p186
        $region30: #{tpu_custom_call.1} parent=23 // pred_check_branch
          %189 = sbr.rel (%p187) target = $region32
        $region31: #{tpu_custom_call.1} parent=23 // pred_region
          %vm190 = vcmask 3072
          %191 = vst.msk [vmem:[%s181] sm:$0xf] %vm190, 0.0
          %192 = vst.msk [vmem:[%s185] sm:$0xf] %vm190, 0.0
        $region32: #{tpu_custom_call.1} parent=23 // pred_fallthru
          _
        %v193 = vld [vmem:[%s154] sm:$0xf]
        %v194 = vld [vmem:[%s181] sm:$0xf]
        %vm195 = vcmask 1043456
        %v196 = vsel %vm195, %v193, 0.0
        %197 = vadd.xlane.f32.xlu0 %v196
        %v198 = vpop.xlane.xlu0 %197
        %v199 = vadd.f32 %v194, %v198
        %vm200 = vcmask 3072
        %201 = vst.msk [vmem:[%s181] sm:$0xf] %vm200, %v199
        %v202 = vld [vmem:[%s185] sm:$0xf]
        %v203 = vmul.f32 %v193, %v193
        %v204 = vsel %vm195, %v203, 0.0
        %205 = vadd.xlane.f32.xlu0 %v204
        %v206 = vpop.xlane.xlu0 %205
        %v207 = vadd.f32 %v202, %v206
        %208 = vst.msk [vmem:[%s185] sm:$0xf] %vm200, %v207
        %p209 = scmp.lt.s32.totalorder %s21, 1
        %s210 = scalar_select %p209, %s21, 1
        %s211 = smul.addr %s210, 4
        %s212 = scalar_lea.vmem %s1, %s211
        %p213 = scmp.lt.s32.totalorder %s21, 1
        %s214 = scalar_select %p213, %s21, 1
        %s215 = smul.addr %s214, 4
        %s216 = scalar_lea.vmem %s2, %s215
        // Predicated region
        $region33: #{tpu_custom_call.1} parent=23 // pred_check
          %p217 = pneg %p75
        $region34: #{tpu_custom_call.1} parent=23 // pred_check_branch
          %219 = sbr.rel (%p217) target = $region36
        $region35: #{tpu_custom_call.1} parent=23 // pred_region
          _
        $region36: #{tpu_custom_call.1} parent=23 // pred_fallthru
          _
        // Predicated region
        $region37: #{tpu_custom_call.1} parent=23 // pred_check
          %p220 = pneg %p101
        $region38: #{tpu_custom_call.1} parent=23 // pred_check_branch
          %222 = sbr.rel (%p220) target = $region40
        $region39: #{tpu_custom_call.1} parent=23 // pred_region
          _
        $region40: #{tpu_custom_call.1} parent=23 // pred_fallthru
          _
      $region24: #{tpu_custom_call.1} parent=5 // pred_fallthru
        _
      %p223 = scmp.le.s32.totalorder 2, %s12
      // Predicated region
      $region41: #{tpu_custom_call.1} parent=5 // pred_check
        %p224 = pneg %p223
      $region42: #{tpu_custom_call.1} parent=5 // pred_check_branch
        %226 = sbr.rel (%p224) target = $region44
      $region43: #{tpu_custom_call.1} parent=5 // pred_region
        %s227 = ssub.s32 %s12, 2
        // Predicated region
        $region45: #{tpu_custom_call.1} parent=43 // pred_check
          %p228 = pneg %p81
        $region46: #{tpu_custom_call.1} parent=43 // pred_check_branch
          %230 = sbr.rel (%p228) target = $region48
        $region47: #{tpu_custom_call.1} parent=43 // pred_region
          %p231 = scmp.lt.s32.totalorder %s23, 1
          %s232 = scalar_select %p231, %s23, 1
          %s233 = smul.addr %s232, 4
          %s234 = scalar_lea.vmem %s1, %s233
        $region48: #{tpu_custom_call.1} parent=43 // pred_fallthru
          _
        // Predicated region
        $region49: #{tpu_custom_call.1} parent=43 // pred_check
          %p235 = pneg %p107
        $region50: #{tpu_custom_call.1} parent=43 // pred_check_branch
          %237 = sbr.rel (%p235) target = $region52
        $region51: #{tpu_custom_call.1} parent=43 // pred_region
          %p238 = scmp.lt.s32.totalorder %s23, 1
          %s239 = scalar_select %p238, %s23, 1
          %s240 = smul.addr %s239, 4
          %s241 = scalar_lea.vmem %s2, %s240
        $region52: #{tpu_custom_call.1} parent=43 // pred_fallthru
          _
      $region44: #{tpu_custom_call.1} parent=5 // pred_fallthru
        _
    $region6: #{tpu_custom_call.1} parent=1 // loop_footer
      %s16 = sadd.s32 1, %s12
    $region7: #{tpu_custom_call.1} parent=1 // loop_footer_branch
      %11 = sbr.rel target = $region3
    $region8: #{tpu_custom_call.1} parent=1 // loop_exit
      _
    %242 = vsyncpa [#allocation3], 1
    %s243 = scalar_lea.sflag [#allocation3], 1
    %244 = vsyncpa %s243, 1

</llo_original>
